<compile_context>
chip_gen: v7x
topology: tpu7x:2x2x1
jax: 0.10.0
libtpu: 0.0.40
codegen_flags: <defaults>
</compile_context>

<pallas_src>
import functools
import math

import jax
import jax.numpy as jnp
import numpy as np
from jax.experimental import pallas as pl
from jax.experimental.pallas import tpu as pltpu

_CIN_PAD = 8  # conv1 input channels padded 3 -> 8 (clean sublane/MXU contraction dim)


# ------------------------------ constant operators ------------------------------

def _make_masks(H, W):
    """masks[t, m] = 1 if 3x3 tap t=(di+1)*3+(dj+1) reads a real (non zero-padding) pixel."""
    m = jnp.arange(H * W)
    h, w = m // W, m % W
    rows = []
    for t in range(9):
        di, dj = t // 3 - 1, t % 3 - 1
        ok = (h + di >= 0) & (h + di < H) & (w + dj >= 0) & (w + dj < W)
        rows.append(ok.astype(jnp.float32))
    return jnp.stack(rows)                                      # [9, H*W]


def _make_subsample(H, W):
    """S[m, m'] = 1 iff full-res position m is the stride-2 source of output position m'."""
    Ho, Wo = H // 2, W // 2
    mo = jnp.arange(Ho * Wo)
    src = (mo // Wo) * (2 * W) + (mo % Wo) * 2
    return (jnp.arange(H * W)[:, None] == src[None, :]).astype(jnp.float32)   # [H*W, Ho*Wo]


def _make_tap_mats(H, W):
    """T[t][m_src, m_dst] so that (A @ T[t])[:, m] = A[:, m + delta_t] (0 at padding)."""
    M = H * W
    m = jnp.arange(M)
    h, w = m // W, m % W
    mats = []
    for t in range(9):
        di, dj = t // 3 - 1, t % 3 - 1
        ok = (h + di >= 0) & (h + di < H) & (w + dj >= 0) & (w + dj < W)
        src = m + di * W + dj
        T = (jnp.arange(M)[:, None] == src[None, :]) & ok[None, :]
        mats.append(T.astype(jnp.float32))
    return jnp.stack(mats)                                      # [9, M, M]


def build_constants():
    return [
        _make_masks(32, 32),        # [9, 1024]
        _make_masks(16, 16),        # [9, 256]
        _make_tap_mats(8, 8),       # [9, 64, 64]
        _make_subsample(32, 32),    # [1024, 256]
        _make_subsample(16, 16),    # [256, 64]
    ]


# ------------------------------ parameter construction ------------------------------

def _block_diag(mats):
    r = sum(m.shape[0] for m in mats)
    c = sum(m.shape[1] for m in mats)
    out = jnp.zeros((r, c), jnp.float32)
    ro = co = 0
    for m in mats:
        out = out.at[ro:ro + m.shape[0], co:co + m.shape[1]].set(m)
        ro += m.shape[0]
        co += m.shape[1]
    return out


def _bn_fold(cout, eps=1e-5):
    # Inference-mode fold (general formula); module's deterministic BN init gives bias == 0.
    gamma = jnp.ones((cout,), jnp.float32)
    beta = jnp.zeros((cout,), jnp.float32)
    mean = jnp.zeros((cout,), jnp.float32)
    var = jnp.ones((cout,), jnp.float32)
    scale = gamma / jnp.sqrt(var + eps)
    bias = beta - mean * scale
    return scale, bias.reshape(cout, 1)


def init_params(key, depth, num_branches, num_classes):
    """Logical per-layer parameters with the BN scale already folded into the conv weights."""
    n = (depth - 2) // 6                      # BasicBlock count per layer (bottleneck=False)
    keys = iter(jax.random.split(key, 512))

    def conv3(cin, cout, cin_pad=None):
        # matches m.weight.data.normal_(0, sqrt(2 / (k*k*out_channels)))
        std = math.sqrt(2.0 / (9.0 * cout))
        w = std * jax.random.normal(next(keys), (9, cout, cin), jnp.float32)
        if cin_pad is not None and cin_pad > cin:
            w = jnp.pad(w, ((0, 0), (0, 0), (0, cin_pad - cin)))
        scale, bias = _bn_fold(cout)
        return w * scale[None, :, None], bias

    def conv1x1(cin, cout):
        std = math.sqrt(2.0 / (1.0 * cout))
        w = std * jax.random.normal(next(keys), (cout, cin), jnp.float32)
        scale, bias = _bn_fold(cout)
        return w * scale[:, None], bias

    def make_block(cin, cout, stride):
        blk = {}
        blk['w1'], blk['b1'] = conv3(cin, cout)
        blk['w2'], blk['b2'] = conv3(cout, cout)
        if stride != 1 or cin != cout:
            blk['wd'], blk['bd'] = conv1x1(cin, cout)
        return blk

    logical = {}
    w, b = conv3(3, 16, cin_pad=_CIN_PAD)
    logical['conv1'] = {'w': w, 'b': b}
    logical['layer1'] = [make_block(16, 16, 1) for _ in range(n)]
    logical['layer2'] = [make_block(16, 32, 2)] + [make_block(32, 32, 1) for _ in range(n - 1)]
    logical['layer3'] = [
        [make_block(32, 64, 2)] + [make_block(64, 64, 1) for _ in range(n - 1)]
        for _ in range(num_branches)
    ]
    bound = 1.0 / math.sqrt(64.0)
    cls = []
    for _ in range(num_branches):
        kw, kb = jax.random.split(next(keys))
        wc = jax.random.uniform(kw, (num_classes, 64), jnp.float32, -bound, bound)
        bc = jax.random.uniform(kb, (num_classes,), jnp.float32, -bound, bound)
        cls.append((wc, bc))
    logical['cls'] = cls
    return logical, n


def pack_kernel_params(logical, n, num_branches):
    """Flatten + fuse the logical params into the kernel's positional input list (done once)."""
    nb = num_branches
    L3 = logical['layer3']
    wl = [logical['conv1']['w'], logical['conv1']['b']]
    for blk in logical['layer1']:
        wl += [blk['w1'], blk['b1'], blk['w2'], blk['b2']]
    for i, blk in enumerate(logical['layer2']):
        wl += [blk['w1'], blk['b1'], blk['w2'], blk['b2']]
        if i == 0:
            wl += [blk['wd'], blk['bd']]

    def cat(name, i):
        return jnp.concatenate([L3[br][i][name] for br in range(nb)], axis=0)

    def bdiag(name, i):
        return jnp.stack([_block_diag([L3[br][i][name][t] for br in range(nb)])
                          for t in range(9)])

    # First layer3 block: all branches read the same input -> stack Cout (N = 64*nb, MXU/lane dense)
    wl += [jnp.concatenate([L3[br][0]['w1'] for br in range(nb)], axis=1), cat('b1', 0),
           bdiag('w2', 0), cat('b2', 0),
           jnp.concatenate([L3[br][0]['wd'] for br in range(nb)], axis=0), cat('bd', 0)]
    for i in range(1, n):
        wl += [bdiag('w1', i), cat('b1', i), bdiag('w2', i), cat('b2', i)]

    wc = _block_diag([logical['cls'][br][0] for br in range(nb)])          # [nb*ncls, nb*64]
    bc = jnp.concatenate([logical['cls'][br][1] for br in range(nb)]).reshape(-1, 1)
    wl += [wc, bc]
    return wl


# ------------------------------ the fused Pallas kernel ------------------------------

def _make_kernel(n, roll_is_numpy):
    def shift_lanes(x, delta):
        # y[:, m] = x[:, (m + delta) % M]; wrapped entries are zeroed by the caller's mask.
        M = x.shape[-1]
        s = (-delta) % M if roll_is_numpy else delta % M
        return pltpu.roll(x, s, 1)

    def conv_taps(xin, w, masks, width):
        # 3x3 conv == 9 accumulating MXU matmuls on shifted+masked copies (im2col in-kernel).
        acc = None
        for t in range(9):
            di, dj = t // 3 - 1, t % 3 - 1
            delta = di * width + dj
            xs = xin if delta == 0 else shift_lanes(xin, delta)
            if t != 4:                        # center tap never touches padding
                xs = xs * masks[t:t + 1, :]
            c = jnp.dot(w[t], xs, preferred_element_type=jnp.float32)
            acc = c if acc is None else acc + c
        return acc

    def conv_taps_mat(xin, w, tapmats):
        # same, with shift+mask folded into [M, M] tap operators (8x8 stage, M=64 < one vreg).
        acc = None
        for t in range(9):
            xs = jnp.dot(xin, tapmats[t], preferred_element_type=jnp.float32)
            c = jnp.dot(w[t], xs, preferred_element_type=jnp.float32)
            acc = c if acc is None else acc + c
        return acc

    def kernel(*refs):
        out_ref = refs[-1]
        it = iter(refs[:-1])
        x_ref = next(it)
        m32 = next(it)[...]
        m16 = next(it)[...]
        t8 = next(it)[...]
        s1 = next(it)[...]
        s2 = next(it)[...]

        def wb():
            return next(it)[...], next(it)[...]

        relu = lambda v: jnp.maximum(v, 0.0)
        dot = functools.partial(jnp.dot, preferred_element_type=jnp.float32)

        a = x_ref[...]                                                # [8, 1024]

        # stem: conv3x3 + folded BN + ReLU                              @ 32x32
        w, b = wb()
        a = relu(conv_taps(a, w, m32, 32) + b)                        # [16, 1024]

        # layer1: n BasicBlocks, stride 1                               @ 32x32
        for _ in range(n):
            w1, b1 = wb(); w2, b2 = wb()
            h = relu(conv_taps(a, w1, m32, 32) + b1)
            h = conv_taps(h, w2, m32, 32) + b2
            a = relu(h + a)

        # layer2 block 0: 3x3 s2 -> 3x3 s1, 1x1 s2 downsample            32x32 -> 16x16
        w1, b1 = wb(); w2, b2 = wb(); wd, bd = wb()
        h = relu(dot(conv_taps(a, w1, m32, 32), s1) + b1)             # [32, 256]
        h = conv_taps(h, w2, m16, 16) + b2
        idn = dot(wd, dot(a, s1)) + bd
        a = relu(h + idn)                                             # [32, 256]
        for _ in range(1, n):
            w1, b1 = wb(); w2, b2 = wb()
            h = relu(conv_taps(a, w1, m16, 16) + b1)
            h = conv_taps(h, w2, m16, 16) + b2
            a = relu(h + a)

        # layer3 block 0: all branches fused along Cout (64*nb)          16x16 -> 8x8
        w1, b1 = wb(); w2, b2 = wb(); wd, bd = wb()
        h = relu(dot(conv_taps(a, w1, m16, 16), s2) + b1)             # [64*nb, 64]
        h = conv_taps_mat(h, w2, t8) + b2
        idn = dot(wd, dot(a, s2)) + bd
        a = relu(h + idn)                                             # [64*nb, 64]
        for _ in range(1, n):
            w1, b1 = wb(); w2, b2 = wb()
            h = relu(conv_taps_mat(a, w1, t8) + b1)
            h = conv_taps_mat(h, w2, t8) + b2
            a = relu(h + a)

        # head: AvgPool2d(8) == global mean over the 8x8 map + fused (block-diag) classifiers
        wc, bc = wb()
        pooled = jnp.mean(a, axis=1, keepdims=True)                   # [64*nb, 1]
        out_ref[...] = dot(wc, pooled) + bc                           # [nb*ncls, 1]

    return kernel


def _probe_roll_semantics():
    """Determine pltpu.roll's shift direction once with a tiny kernel (layout-proof)."""
    def k(x_ref, o_ref):
        o_ref[...] = pltpu.roll(x_ref[...], 1, 1)

    x = jnp.tile(jnp.arange(128, dtype=jnp.float32)[None, :], (8, 1))
    out = pl.pallas_call(k, out_shape=jax.ShapeDtypeStruct((8, 128), jnp.float32))(x)
    v = float(out[0, 0])
    if v == 127.0:
        return True             # numpy semantics: result[i] = x[i - shift]
    if v == 1.0:
        return False            # opposite convention
    raise RuntimeError(f"unexpected pltpu.roll probe result: {v}")


def _const_index_map(ndim):
    return lambda b: (0,) * ndim


def pallas_forward(x_nchw, packed_params, consts, n, num_branches, num_classes,
                   roll_is_numpy):
    B, C, H, W = x_nchw.shape
    assert (H, W) == (32, 32), "CIFAR 32x32 input required (AvgPool2d(8) after two stride-2 stages)"
    x_cm = jnp.pad(x_nchw.astype(jnp.float32),
                   ((0, 0), (0, _CIN_PAD - C), (0, 0), (0, 0))).reshape(B, _CIN_PAD, H * W)

    in_arrays = [x_cm] + list(consts) + list(packed_params)
    in_specs = [pl.BlockSpec((None, _CIN_PAD, H * W), lambda b: (b, 0, 0))]
    for arr in list(consts) + list(packed_params):
        in_specs.append(pl.BlockSpec(arr.shape, _const_index_map(arr.ndim)))

    out_dim = num_branches * num_classes
    out = pl.pallas_call(
        _make_kernel(n, roll_is_numpy),
        out_shape=jax.ShapeDtypeStruct((B, out_dim, 1), jnp.float32),
        grid=(B,),
        in_specs=in_specs,
        out_specs=pl.BlockSpec((None, out_dim, 1), lambda b: (b, 0, 0)),
        compiler_params=pltpu.CompilerParams(
            dimension_semantics=("parallel",),        # v7x: one image per TensorCore
            vmem_limit_bytes=32 * 1024 * 1024,        # ~8 MiB used; safe on v5e/v6e/v7x
        ),
    )(*in_arrays)

    logits = out[:, :, 0].reshape(B, num_branches, num_classes)
    ind = jnp.transpose(logits, (0, 2, 1))                            # [B, ncls, nb]
    x_en = jnp.mean(ind[:, :, : num_branches - 1], axis=2)            # mean of first nb-1 branches
    x_c = jnp.full((B, num_branches - 1), 1.0 / (num_branches - 1), jnp.float32)
    return ind, x_en, x_c


# ------------------------------ plain-JAX reference (for validation) ------------------------------

def _ref_conv3x3(x, w, b, stride, prec):
    Bn, Cin, H, W = x.shape
    Cout = w.shape[1]
    Ho = (H + 2 - 3) // stride + 1
    Wo = (W + 2 - 3) // stride + 1
    xp = jnp.pad(x, ((0, 0), (0, 0), (1, 1), (1, 1)))
    out = jnp.zeros((Bn, Cout, Ho, Wo), jnp.float32)
    for t in range(9):
        ki, kj = t // 3, t % 3
        xs = xp[:, :, ki:ki + stride * (Ho - 1) + 1:stride,
                      kj:kj + stride * (Wo - 1) + 1:stride]
        out = out + jnp.einsum('oc,bchw->bohw', w[t], xs, precision=prec)
    return out + b.reshape(1, Cout, 1, 1)


def _ref_block(x, blk, stride, prec):
    if 'wd' in blk:
        idn = jnp.einsum('oc,bchw->bohw', blk['wd'], x[:, :, ::stride, ::stride],
                         precision=prec) + blk['bd'].reshape(1, -1, 1, 1)
    else:
        idn = x
    h = jax.nn.relu(_ref_conv3x3(x, blk['w1'], blk['b1'], stride, prec))
    h = _ref_conv3x3(h, blk['w2'], blk['b2'], 1, prec)
    return jax.nn.relu(h + idn)


def reference_forward(logical, x_nchw, num_branches):
    prec = jax.lax.Precision.HIGHEST
    B, C = x_nchw.shape[:2]
    x = jnp.pad(x_nchw.astype(jnp.float32), ((0, 0), (0, _CIN_PAD - C), (0, 0), (0, 0)))
    a = jax.nn.relu(_ref_conv3x3(x, logical['conv1']['w'], logical['conv1']['b'], 1, prec))
    for blk in logical['layer1']:
        a = _ref_block(a, blk, 1, prec)
    for i, blk in enumerate(logical['layer2']):
        a = _ref_block(a, blk, 2 if i == 0 else 1, prec)
    outs = []
    for br in range(num_branches):
        h = a
        for i, blk in enumerate(logical['layer3'][br]):
            h = _ref_block(h, blk, 2 if i == 0 else 1, prec)
        pooled = jnp.mean(h, axis=(2, 3))
        wc, bc = logical['cls'][br]
        outs.append(jnp.einsum('bc,oc->bo', pooled, wc, precision=prec) + bc)
    ind = jnp.stack(outs, axis=-1)
    x_en = jnp.mean(ind[:, :, : num_branches - 1], axis=2)
    return ind, x_en


# --------------------------------------- main ---------------------------------------

if __name__ == "__main__":
    depth = 8            # n = (depth - 2) // 6 = 1 BasicBlock per layer
    num_branches = 3
    num_classes = 10     # dataset='cifar10'

    key = jax.random.PRNGKey(0)
    kx, kp = jax.random.split(key)
    # CIFAR-sized input (32x32 required: two stride-2 stages -> 8x8 before AvgPool2d(8))
    x = jax.random.normal(kx, (2, 3, 32, 32), jnp.float32)

    logical, n = init_params(kp, depth, num_branches, num_classes)
    packed = pack_kernel_params(logical, n, num_branches)    # one-time parameter packing
    consts = build_constants()                               # masks / subsample / tap operators
    roll_is_numpy = _probe_roll_semantics()

    ind, x_en, x_c = pallas_forward(x, packed, consts, n, num_branches, num_classes,
                                    roll_is_numpy)
    jax.block_until_ready((ind, x_en, x_c))

    assert ind.shape == (2, num_classes, num_branches)
    assert x_en.shape == (2, num_classes)
    assert x_c.shape == (2, num_branches - 1)

    # Numerical self-check against a plain-JAX (HIGHEST precision) reference of the same network.
    ind_ref, x_en_ref = reference_forward(logical, x, num_branches)
    np.testing.assert_allclose(np.asarray(ind), np.asarray(ind_ref), rtol=5e-2, atol=5e-2)
    np.testing.assert_allclose(np.asarray(x_en), np.asarray(x_en_ref), rtol=5e-2, atol=5e-2)

    print("KERNEL_OK")
</pallas_src>

<mosaic_0001>
module attributes {stable_mosaic.version = 11 : i64} {
  func.func @k(%arg0: memref<8x128xf32, #tpu.memory_space<vmem>>, %arg1: memref<8x128xf32, #tpu.memory_space<vmem>>) attributes {dimension_semantics = [], scalar_prefetch = 0 : i64, scratch_operands = 0 : i64, tpu.core_type = #tpu.core_type<tc>} {
    %c0 = arith.constant 0 : index
    %c0_0 = arith.constant 0 : index
    %0 = vector.load %arg0[%c0, %c0_0] : memref<8x128xf32, #tpu.memory_space<vmem>>, vector<8x128xf32>
    %c1_i32 = arith.constant 1 : i32
    %1 = tpu.dynamic_rotate %0 by %c1_i32 dim 1 : vector<8x128xf32>, i32 -> vector<8x128xf32>
    %c0_1 = arith.constant 0 : index
    %c0_2 = arith.constant 0 : index
    %2 = vector.load %arg1[%c0_1, %c0_2] : memref<8x128xf32, #tpu.memory_space<vmem>>, vector<8x128xf32>
    tpu.vector_store %arg1[%c0_1, %c0_2], %1 {strides = array<i32>} : memref<8x128xf32, #tpu.memory_space<vmem>>, vector<8x128xf32>,
    return
  }
}

</mosaic_0001>

<llo_original>
// kernel: tpu_custom_call.1
$region0: #{tpu_custom_call.1}
  #allocation0 [shape = 'u32[]', space=smem, size = 0x4, offset = 0x4, fixed_abs, tag = 'smem constant byte address 0x4 - core index']
  #allocation1 [shape = 'u32[144,128]{1,0:T(1,128)}', space=vmem, size = 0x12000, scoped, tag = 'internal scratch']
  %s0 = inlined_call_operand.hbm [shape: f32[8,128], index: 0, kind: input, shape index: {}]
  %s1 = inlined_call_operand.hbm [shape: f32[8,128], index: 1, kind: output, shape index: {}]
  %s2 = sld [smem:[#allocation0]]
  $region18: #{tpu_custom_call.1} parent=0
    _
  %s4 = ssub.s32 1, %s2
  %s5 = scalar_select 0, %s4, %s2
  $region1: #{tpu_custom_call.1} parent=0
    #allocation2 [shape = 'u8[4096]{0}', space=vmem, size = 0x1000, scoped, tag = 'input window, operand 0, single buffered']
    #allocation3 [shape = 's32[1]{0}', space=sflag, size = 0x4, scoped, tag = 'scoped memory for tpu_custom_call.1']
    #allocation4 [shape = 's32[1]{0}', space=sflag, size = 0x4, scoped, tag = 'scoped memory for tpu_custom_call.1']
    #allocation5 [shape = 'u8[4096]{0}', space=vmem, size = 0x1000, scoped, tag = 'output window, operand 0, single buffered']
    %6 = vsyncpa [#allocation3], 0
    %7 = vsyncpa [#allocation4], 0
    // Predicated region
    $region2: #{tpu_custom_call.1} parent=1 // pred_check
      _
    $region3: #{tpu_custom_call.1} parent=1 // pred_check_branch
      %9 = sbr.rel (0) target = $region5
    $region4: #{tpu_custom_call.1} parent=1 // pred_region
      %s11 = ssub.s32 128, 128
      %12 = vsyncadd [#allocation3], %s11
      %s14 = sshll.u32 [#allocation2], 4
      %s15 = int_to_ptr.vmem [resolvable:$true] %s14
      %17 = dma.hbm_to_vmem [thread:$0]  %s0, 128, %s15, [#allocation3]
    $region5: #{tpu_custom_call.1} parent=1 // pred_fallthru
      _
    // Predicated region
    $region6: #{tpu_custom_call.1} parent=1 // pred_check
      _
    $region7: #{tpu_custom_call.1} parent=1 // pred_check_branch
      %19 = sbr.rel (0) target = $region9
    $region8: #{tpu_custom_call.1} parent=1 // pred_region
      %20 = dma.done [#allocation3], 128
    $region9: #{tpu_custom_call.1} parent=1 // pred_fallthru
      _
    %v21 = vld [vmem:[#allocation2] sm:$0xff]
    %22 = vrot.lane.b32.xlu0 %v21, 1
    %v23 = vpop.permute.xlu0 %22
    %24 = vst [vmem:[#allocation5] sm:$0xff] %v23
    // Predicated region
    $region10: #{tpu_custom_call.1} parent=1 // pred_check
      _
    $region11: #{tpu_custom_call.1} parent=1 // pred_check_branch
      %26 = sbr.rel (0) target = $region13
    $region12: #{tpu_custom_call.1} parent=1 // pred_region
      %s28 = ssub.s32 128, 128
      %29 = vsyncadd [#allocation4], %s28
      %s31 = sshll.u32 [#allocation5], 4
      %s32 = int_to_ptr.vmem [resolvable:$true] %s31
      %34 = dma.vmem_to_hbm [thread:$0]  %s32, 128, %s1, [#allocation4]
    $region13: #{tpu_custom_call.1} parent=1 // pred_fallthru
      _
    // Predicated region
    $region14: #{tpu_custom_call.1} parent=1 // pred_check
      _
    $region15: #{tpu_custom_call.1} parent=1 // pred_check_branch
      %36 = sbr.rel (0) target = $region17
    $region16: #{tpu_custom_call.1} parent=1 // pred_region
      %37 = dma.done [#allocation4], 128
    $region17: #{tpu_custom_call.1} parent=1 // pred_fallthru
      _
    %38 = vsyncpa [#allocation3], 1
    %39 = vsyncpa [#allocation4], 1

</llo_original>
